<compile_context>
chip_gen: v6e
topology: v6e:2x2x1
jax: 0.10.0
libtpu: 0.0.40
codegen_flags: <defaults>
</compile_context>

<pallas_src>
import functools

import numpy as np
import jax
import jax.numpy as jnp
from jax.experimental import pallas as pl
from jax.experimental.pallas import tpu as pltpu


# ------------------------------- kernel ------------------------------------
def _ntxent_perpos_kernel(z1_ref, z2_ref, out_ref, *, B, C, cc,
                          temperature, normalize):
    """z1_ref, z2_ref: (B*C, TP) blocks in native dtype, rows grouped by
    sample (row b*C + c  =  channel c of sample b).  out_ref: (1, TP) f32.

    For every position p (lane) this writes the NT-Xent cross-entropy loss
    (mean over the 2B anchors) between the per-position (B, C) feature
    matrices of the two views to out_ref[0, p].
    """
    f32 = jnp.float32
    z1 = z1_ref[...].astype(f32)                       # (B*C, TP)
    z2 = z2_ref[...].astype(f32)

    # Per-sample (C, TP) row-groups; global row g in [0, 2B):
    #   0..B-1  -> view i samples, B..2B-1 -> view j samples.
    g1 = [z1[b * C:(b + 1) * C] for b in range(B)]
    g2 = [z2[b * C:(b + 1) * C] for b in range(B)]
    gall = g1 + g2

    # ---- static index tables ----------------------------------------------
    # Similarity list: all B^2 cross-view pairs, then the strict upper
    # triangles of the two symmetric intra-view grams (diagonals are unused).
    pairs = [(a, B + b) for a in range(B) for b in range(B)]           # S_ij
    tri = [(a, b) for a in range(B) for b in range(a + 1, B)]
    pairs += tri                                                       # S_ii
    pairs += [(B + a, B + b) for (a, b) in tri]                        # S_jj
    n_sims = len(pairs)
    n_tri = len(tri)
    assert n_sims == 2 * B * B - B

    def ij(a, b):                      # sim-row index of S_ij[a, b]
        return a * B + b

    def ii(a, b):
        a, b = (a, b) if a < b else (b, a)
        return B * B + tri.index((a, b))

    def jj(a, b):
        a, b = (a, b) if a < b else (b, a)
        return B * B + n_tri + tri.index((a, b))

    # Per-anchor logit rows (positive logit first): 2B anchors x (2B-1).
    anchor_rows = []
    for r in range(B):                 # anchors of view i
        anchor_rows.append([ij(r, r)]
                           + [ii(r, c) for c in range(B) if c != r]
                           + [ij(r, c) for c in range(B) if c != r])
    for r in range(B):                 # anchors of view j  (S_ji[r,c]==S_ij[c,r])
        anchor_rows.append([ij(r, r)]
                           + [jj(r, c) for c in range(B) if c != r]
                           + [ij(c, r) for c in range(B) if c != r])
    # TODO(synk): for very large B (>~32) switch the unrolled sim/anchor
    # tables to an in-kernel fori_loop to bound the trace size.

    # ---- similarities: one batched product per channel chunk ---------------
    # sims[k] = <row pairs[k][0], row pairs[k][1]>: elementwise product on the
    # VPU over sublane-stacked slabs + a batched cross-sublane reduce on the
    # otherwise-idle XLU.
    sims = None
    for c0 in range(0, C, cc):
        c1 = min(C, c0 + cc)
        A = jnp.stack([gall[a][c0:c1] for (a, _) in pairs], axis=0)
        Bm = jnp.stack([gall[b][c0:c1] for (_, b) in pairs], axis=0)
        part = jnp.sum(A * Bm, axis=1)                 # (n_sims, TP)
        sims = part if sims is None else sims + part

    if normalize:
        # F.normalize(z, p=2, dim=-1): fold 1/max(||z||, 1e-12) of both rows
        # into each similarity (rsqrt rides the EUP; no divides and no
        # broadcast back onto the (B*C, TP) features).
        ssq = None
        for c0 in range(0, C, cc):
            c1 = min(C, c0 + cc)
            st = jnp.stack([g[c0:c1] for g in gall], axis=0)   # (2B, cc, TP)
            p = jnp.sum(st * st, axis=1)                       # (2B, TP)
            ssq = p if ssq is None else ssq + p
        invn = jax.lax.rsqrt(jnp.maximum(ssq, f32(1e-24)))     # (2B, TP)
        inv_a = jnp.concatenate([invn[a:a + 1] for (a, _) in pairs], axis=0)
        inv_b = jnp.concatenate([invn[b:b + 1] for (_, b) in pairs], axis=0)
        sims = sims * (inv_a * inv_b)

    sims = sims * f32(1.0 / temperature)                       # (n_sims, TP)

    # ---- batched per-anchor logsumexp --------------------------------------
    logits = jnp.stack(
        [jnp.concatenate([sims[i:i + 1] for i in row], axis=0)
         for row in anchor_rows], axis=0)                      # (2B, 2B-1, TP)
    m = jnp.max(logits, axis=1, keepdims=True)                 # (2B, 1, TP)
    lse = m + jnp.log(jnp.sum(jnp.exp(logits - m), axis=1, keepdims=True))
    per_anchor = lse - logits[:, 0:1, :]                       # (2B, 1, TP)
    loss = jnp.sum(per_anchor, axis=0) * f32(1.0 / (2 * B))    # (1, TP)
    out_ref[...] = loss.astype(out_ref.dtype)


# --------------------------- tiling / launch ---------------------------------
def _round_up(x, m):
    return ((x + m - 1) // m) * m


def _cdiv(a, b):
    return -(-a // b)


def _vmem_capacity_bytes():
    # Per-generation physical VMEM (v5e/v6e: 128 MiB, v7x: 64 MiB per core).
    try:
        cap = getattr(pltpu.get_tpu_info(), "vmem_capacity_bytes", None)
        if cap:
            return int(cap)
    except Exception:
        pass
    return 64 << 20   # conservative default (v7x)


def _select_tile_p(B, C, cc, itemsize, p_total, vmem_budget):
    """Pick the lane-tile TP (multiple of 128) and the padded position count."""
    n_sims = 2 * B * B - B
    n_anc, n_log = 2 * B, 2 * B - 1

    # Live f32 rows (sublanes) per lane at the busiest point: f32 input copies,
    # A/Bm/product chunk, sims (+ normalize scales), norms, logits + exp, LSE
    # temporaries.  Keeps the working set inside the 64 x 4 KiB vreg file.
    live_rows = (2 * B * C + 3 * n_sims * cc + 3 * n_sims + 4 * B
                 + 2 * n_anc * n_log + 3 * n_anc)
    vreg_file_bytes = 64 * 4 * 1024
    tp_vreg = max(256, (vreg_file_bytes // (4 * live_rows)) // 128 * 128)

    # VMEM bytes per lane: double-buffered native inputs + f32 copies +
    # intermediates + double-buffered output row.
    per_lane = (2 * 2 * B * C * itemsize + 2 * B * C * 4
                + (3 * n_sims * cc + 3 * n_sims + 4 * B
                   + 2 * n_anc * n_log + 3 * n_anc) * 4 + 2 * 4)
    tp_vmem = max(128, (vmem_budget // per_lane) // 128 * 128)

    tp_cap = max(128, min(tp_vreg, tp_vmem, 4096))
    n_steps = _cdiv(p_total, tp_cap)
    if p_total >= 256:
        n_steps = max(n_steps, 2)      # keep both v7x TensorCores busy
    tp = _round_up(_cdiv(p_total, n_steps), 128)
    n_steps = _cdiv(p_total, tp)
    return tp, n_steps * tp


def _per_position_losses(z1, z2, B, C, cc, tp, temperature, normalize,
                         vmem_limit):
    """z1, z2: (B*C, P) with P a multiple of tp.  Returns a (1, P) f32 array
    of per-position NT-Xent losses (each already the mean over 2B anchors)."""
    BC, P = z1.shape
    grid = (P // tp,)
    return pl.pallas_call(
        functools.partial(_ntxent_perpos_kernel, B=B, C=C, cc=cc,
                          temperature=float(temperature),
                          normalize=bool(normalize)),
        out_shape=jax.ShapeDtypeStruct((1, P), jnp.float32),
        grid=grid,
        in_specs=[
            pl.BlockSpec((BC, tp), lambda p: (0, p)),
            pl.BlockSpec((BC, tp), lambda p: (0, p)),
        ],
        out_specs=pl.BlockSpec((1, tp), lambda p: (0, p)),
        compiler_params=pltpu.CompilerParams(
            # Disjoint lane-dense output blocks -> fully parallel grid.
            dimension_semantics=("parallel",),
            vmem_limit_bytes=int(vmem_limit),
        ),
    )(z1, z2)


# -------------------------------- wrapper -------------------------------------
def upsample_loss(upsample_1, upsample_2, normalize=False, temperature=1.0):
    """JAX/Pallas equivalent of UpsampleLoss.forward.

    upsample_1, upsample_2: dicts of NCHW arrays (same keys/order & shapes).
    """
    mats_1 = list(upsample_1.values())
    mats_2 = list(upsample_2.values())
    assert len(mats_1) == len(mats_2), (
        f"Number of tensors in upsample loss not equal: "
        f"{len(mats_1)}, {len(mats_2)}")

    vmem_cap = _vmem_capacity_bytes()
    vmem_budget = vmem_cap // 2                      # per-lane estimate already
    vmem_limit = min(int(vmem_cap * 3 // 4), 96 << 20)   # includes 2x buffering

    total_sum = jnp.float32(0.0)
    total_count = 0
    for x1, x2 in zip(mats_1, mats_2):
        x1 = jnp.asarray(x1)
        x2 = jnp.asarray(x2)
        assert x1.shape == x2.shape, (x1.shape, x2.shape)
        B, C = int(x1.shape[0]), int(x1.shape[1])
        # Free reshape of the contiguous NCHW level to a sublane-dense
        # (B*C, P) view -- no concat across levels, no big HBM pad.
        z1 = x1.reshape(B * C, -1)
        z2 = x2.reshape(B * C, -1)
        P = z1.shape[1]

        n_sims = 2 * B * B - B
        cc = min(C, max(8, 2048 // max(1, 3 * n_sims)))   # channel chunk
        itemsize = jnp.dtype(z1.dtype).itemsize
        tp, p_pad = _select_tile_p(B, C, cc, itemsize, P, vmem_budget)
        if p_pad != P:
            pad = ((0, 0), (0, p_pad - P))
            z1 = jnp.pad(z1, pad)
            z2 = jnp.pad(z2, pad)

        per_pos = _per_position_losses(z1, z2, B, C, cc, tp, temperature,
                                       normalize, vmem_limit)
        total_sum = total_sum + jnp.sum(per_pos[0, :P])
        total_count += P
    return total_sum / jnp.float32(total_count)


# ----------------------------- pure-numpy reference --------------------------
def _contrastive_ref_np(zi, zj, temperature, normalize):
    zi = np.asarray(zi, np.float64)
    zj = np.asarray(zj, np.float64)
    if normalize:
        zi = zi / np.maximum(np.linalg.norm(zi, axis=-1, keepdims=True), 1e-12)
        zj = zj / np.maximum(np.linalg.norm(zj, axis=-1, keepdims=True), 1e-12)
    bs = zi.shape[0]
    lii = zi @ zi.T / temperature
    lij = zi @ zj.T / temperature
    lji = zj @ zi.T / temperature
    ljj = zj @ zj.T / temperature
    mask = ~np.eye(bs, dtype=bool)

    def offdiag(m):
        return m[mask].reshape(bs, bs - 1)

    pos = np.concatenate([np.diag(lij), np.diag(lji)])[:, None]
    neg_i = np.concatenate([offdiag(lii), offdiag(lij)], axis=1)
    neg_j = np.concatenate([offdiag(lji), offdiag(ljj)], axis=1)
    neg = np.concatenate([neg_i, neg_j], axis=0)
    logits = np.concatenate([pos, neg], axis=1)
    m = logits.max(axis=1, keepdims=True)
    lse = m[:, 0] + np.log(np.exp(logits - m).sum(axis=1))
    return float((lse - logits[:, 0]).mean())


def _upsample_loss_ref_np(up1, up2, temperature, normalize):
    losses = []
    for x1, x2 in zip(up1.values(), up2.values()):
        B, C = x1.shape[0], x1.shape[1]
        z1 = np.asarray(x1, np.float64).reshape(B, C, -1)
        z2 = np.asarray(x2, np.float64).reshape(B, C, -1)
        for j in range(z1.shape[2]):
            losses.append(_contrastive_ref_np(z1[:, :, j], z2[:, :, j],
                                              temperature, normalize))
    return float(np.mean(losses))


if __name__ == "__main__":
    key = jax.random.PRNGKey(0)
    k1, k2, k3, k4 = jax.random.split(key, 4)

    # Two FPN-like levels, NCHW.
    upsample_1 = {
        "p2": jax.random.normal(k1, (2, 4, 16, 16), dtype=jnp.float32),
        "p3": jax.random.normal(k2, (2, 4, 8, 8), dtype=jnp.float32),
    }
    upsample_2 = {
        "p2": jax.random.normal(k3, (2, 4, 16, 16), dtype=jnp.float32),
        "p3": jax.random.normal(k4, (2, 4, 8, 8), dtype=jnp.float32),
    }

    # normalize=False (module default).
    loss = upsample_loss(upsample_1, upsample_2,
                         normalize=False, temperature=1.0)
    loss = jax.block_until_ready(loss)
    ref = _upsample_loss_ref_np(upsample_1, upsample_2,
                                temperature=1.0, normalize=False)
    assert np.allclose(float(loss), ref, rtol=1e-4, atol=1e-4), (float(loss), ref)

    # normalize=True with a non-trivial temperature (fused-normalization path).
    loss_n = upsample_loss(upsample_1, upsample_2,
                           normalize=True, temperature=0.5)
    loss_n = jax.block_until_ready(loss_n)
    ref_n = _upsample_loss_ref_np(upsample_1, upsample_2,
                                  temperature=0.5, normalize=True)
    assert np.allclose(float(loss_n), ref_n, rtol=1e-4, atol=1e-4), (
        float(loss_n), ref_n)

    print("KERNEL_OK")
</pallas_src>

<mosaic_0001>
module attributes {stable_mosaic.version = 11 : i64} {
  func.func @_ntxent_perpos_kernel(%arg0: i32, %arg1: memref<8x128xf32, #tpu.memory_space<vmem>>, %arg2: memref<8x128xf32, #tpu.memory_space<vmem>>, %arg3: memref<1x128xf32, #tpu.memory_space<vmem>>) attributes {dimension_semantics = [#tpu.dimension_semantics<parallel>], iteration_bounds = array<i64: 2>, scalar_prefetch = 0 : i64, scratch_operands = 0 : i64, tpu.core_type = #tpu.core_type<tc>, window_params = [{transform_indices = @transform_0, window_bounds = array<i64: 8, 128>}, {transform_indices = @transform_1, window_bounds = array<i64: 8, 128>}, {transform_indices = @transform_2, window_bounds = array<i64: 1, 128>}]} {
    %c0 = arith.constant 0 : index
    %c0_0 = arith.constant 0 : index
    %0 = vector.load %arg1[%c0, %c0_0] : memref<8x128xf32, #tpu.memory_space<vmem>>, vector<8x128xf32>
    %c0_1 = arith.constant 0 : index
    %c0_2 = arith.constant 0 : index
    %1 = vector.load %arg2[%c0_1, %c0_2] : memref<8x128xf32, #tpu.memory_space<vmem>>, vector<8x128xf32>
    %2 = vector.extract_strided_slice %0 {offsets = [0, 0], sizes = [4, 128], strides = [1, 1]} : vector<8x128xf32> to vector<4x128xf32>
    %3 = vector.extract_strided_slice %0 {offsets = [4, 0], sizes = [4, 128], strides = [1, 1]} : vector<8x128xf32> to vector<4x128xf32>
    %4 = vector.extract_strided_slice %1 {offsets = [0, 0], sizes = [4, 128], strides = [1, 1]} : vector<8x128xf32> to vector<4x128xf32>
    %5 = vector.extract_strided_slice %1 {offsets = [4, 0], sizes = [4, 128], strides = [1, 1]} : vector<8x128xf32> to vector<4x128xf32>
    %6 = vector.shape_cast %2 : vector<4x128xf32> to vector<1x4x128xf32>
    %7 = vector.shape_cast %2 : vector<4x128xf32> to vector<1x4x128xf32>
    %8 = vector.shape_cast %3 : vector<4x128xf32> to vector<1x4x128xf32>
    %9 = vector.shape_cast %3 : vector<4x128xf32> to vector<1x4x128xf32>
    %10 = vector.shape_cast %2 : vector<4x128xf32> to vector<1x4x128xf32>
    %11 = vector.shape_cast %4 : vector<4x128xf32> to vector<1x4x128xf32>
    %12 = tpu.concatenate %6, %7, %8, %9, %10, %11 in 0 : vector<1x4x128xf32>, vector<1x4x128xf32>, vector<1x4x128xf32>, vector<1x4x128xf32>, vector<1x4x128xf32>, vector<1x4x128xf32> -> vector<6x4x128xf32>
    %13 = vector.shape_cast %4 : vector<4x128xf32> to vector<1x4x128xf32>
    %14 = vector.shape_cast %5 : vector<4x128xf32> to vector<1x4x128xf32>
    %15 = vector.shape_cast %4 : vector<4x128xf32> to vector<1x4x128xf32>
    %16 = vector.shape_cast %5 : vector<4x128xf32> to vector<1x4x128xf32>
    %17 = vector.shape_cast %3 : vector<4x128xf32> to vector<1x4x128xf32>
    %18 = vector.shape_cast %5 : vector<4x128xf32> to vector<1x4x128xf32>
    %19 = tpu.concatenate %13, %14, %15, %16, %17, %18 in 0 : vector<1x4x128xf32>, vector<1x4x128xf32>, vector<1x4x128xf32>, vector<1x4x128xf32>, vector<1x4x128xf32>, vector<1x4x128xf32> -> vector<6x4x128xf32>
    %20 = arith.mulf %12, %19 : vector<6x4x128xf32>
    %cst = arith.constant dense<0.000000e+00> : vector<6x128xf32>
    %21 = vector.multi_reduction <add>, %20, %cst [1] : vector<6x4x128xf32> to vector<6x128xf32>
    %cst_3 = arith.constant 1.000000e+00 : f32
    %22 = vector.broadcast %cst_3 : f32 to vector<6x128xf32>
    %23 = arith.mulf %21, %22 : vector<6x128xf32>
    %24 = vector.extract_strided_slice %23 {offsets = [0, 0], sizes = [1, 128], strides = [1, 1]} : vector<6x128xf32> to vector<1x128xf32>
    %25 = vector.extract_strided_slice %23 {offsets = [4, 0], sizes = [1, 128], strides = [1, 1]} : vector<6x128xf32> to vector<1x128xf32>
    %26 = vector.extract_strided_slice %23 {offsets = [1, 0], sizes = [1, 128], strides = [1, 1]} : vector<6x128xf32> to vector<1x128xf32>
    %27 = tpu.concatenate %24, %25, %26 in 0 : vector<1x128xf32>, vector<1x128xf32>, vector<1x128xf32> -> vector<3x128xf32>
    %28 = vector.extract_strided_slice %23 {offsets = [3, 0], sizes = [1, 128], strides = [1, 1]} : vector<6x128xf32> to vector<1x128xf32>
    %29 = vector.extract_strided_slice %23 {offsets = [4, 0], sizes = [1, 128], strides = [1, 1]} : vector<6x128xf32> to vector<1x128xf32>
    %30 = vector.extract_strided_slice %23 {offsets = [2, 0], sizes = [1, 128], strides = [1, 1]} : vector<6x128xf32> to vector<1x128xf32>
    %31 = tpu.concatenate %28, %29, %30 in 0 : vector<1x128xf32>, vector<1x128xf32>, vector<1x128xf32> -> vector<3x128xf32>
    %32 = vector.extract_strided_slice %23 {offsets = [0, 0], sizes = [1, 128], strides = [1, 1]} : vector<6x128xf32> to vector<1x128xf32>
    %33 = vector.extract_strided_slice %23 {offsets = [5, 0], sizes = [1, 128], strides = [1, 1]} : vector<6x128xf32> to vector<1x128xf32>
    %34 = vector.extract_strided_slice %23 {offsets = [2, 0], sizes = [1, 128], strides = [1, 1]} : vector<6x128xf32> to vector<1x128xf32>
    %35 = tpu.concatenate %32, %33, %34 in 0 : vector<1x128xf32>, vector<1x128xf32>, vector<1x128xf32> -> vector<3x128xf32>
    %36 = vector.extract_strided_slice %23 {offsets = [3, 0], sizes = [1, 128], strides = [1, 1]} : vector<6x128xf32> to vector<1x128xf32>
    %37 = vector.extract_strided_slice %23 {offsets = [5, 0], sizes = [1, 128], strides = [1, 1]} : vector<6x128xf32> to vector<1x128xf32>
    %38 = vector.extract_strided_slice %23 {offsets = [1, 0], sizes = [1, 128], strides = [1, 1]} : vector<6x128xf32> to vector<1x128xf32>
    %39 = tpu.concatenate %36, %37, %38 in 0 : vector<1x128xf32>, vector<1x128xf32>, vector<1x128xf32> -> vector<3x128xf32>
    %40 = vector.shape_cast %27 : vector<3x128xf32> to vector<1x3x128xf32>
    %41 = vector.shape_cast %31 : vector<3x128xf32> to vector<1x3x128xf32>
    %42 = vector.shape_cast %35 : vector<3x128xf32> to vector<1x3x128xf32>
    %43 = vector.shape_cast %39 : vector<3x128xf32> to vector<1x3x128xf32>
    %44 = tpu.concatenate %40, %41, %42, %43 in 0 : vector<1x3x128xf32>, vector<1x3x128xf32>, vector<1x3x128xf32>, vector<1x3x128xf32> -> vector<4x3x128xf32>
    %cst_4 = arith.constant dense<0xFF800000> : vector<4x128xf32>
    %45 = vector.multi_reduction <maximumf>, %44, %cst_4 [1] : vector<4x3x128xf32> to vector<4x128xf32>
    %46 = vector.shape_cast %45 : vector<4x128xf32> to vector<4x1x128xf32>
    %47 = vector.broadcast %46 : vector<4x1x128xf32> to vector<4x3x128xf32>
    %48 = arith.subf %44, %47 : vector<4x3x128xf32>
    %49 = math.exp %48 : vector<4x3x128xf32>
    %cst_5 = arith.constant dense<0.000000e+00> : vector<4x128xf32>
    %50 = vector.multi_reduction <add>, %49, %cst_5 [1] : vector<4x3x128xf32> to vector<4x128xf32>
    %51 = vector.shape_cast %50 : vector<4x128xf32> to vector<4x1x128xf32>
    %52 = math.log %51 : vector<4x1x128xf32>
    %53 = arith.addf %46, %52 : vector<4x1x128xf32>
    %54 = vector.extract_strided_slice %44 {offsets = [0, 0, 0], sizes = [4, 1, 128], strides = [1, 1, 1]} : vector<4x3x128xf32> to vector<4x1x128xf32>
    %55 = arith.subf %53, %54 : vector<4x1x128xf32>
    %cst_6 = arith.constant dense<0.000000e+00> : vector<1x128xf32>
    %56 = vector.multi_reduction <add>, %55, %cst_6 [0] : vector<4x1x128xf32> to vector<1x128xf32>
    %cst_7 = arith.constant 2.500000e-01 : f32
    %57 = vector.broadcast %cst_7 : f32 to vector<1x128xf32>
    %58 = arith.mulf %56, %57 : vector<1x128xf32>
    %c0_8 = arith.constant 0 : index
    %c0_9 = arith.constant 0 : index
    %59 = vector.load %arg3[%c0_8, %c0_9] : memref<1x128xf32, #tpu.memory_space<vmem>>, vector<1x128xf32>
    tpu.vector_store %arg3[%c0_8, %c0_9], %58 {strides = array<i32>} : memref<1x128xf32, #tpu.memory_space<vmem>>, vector<1x128xf32>,
    return
  }
  func.func @transform_0(%arg0: i32) -> (i32, i32) {
    %c0_i32 = arith.constant 0 : i32
    %c0_i32_0 = arith.constant 0 : i32
    return %c0_i32, %arg0 : i32, i32
  }
  func.func @transform_1(%arg0: i32) -> (i32, i32) {
    %c0_i32 = arith.constant 0 : i32
    %c0_i32_0 = arith.constant 0 : i32
    return %c0_i32, %arg0 : i32, i32
  }
  func.func @transform_2(%arg0: i32) -> (i32, i32) {
    %c0_i32 = arith.constant 0 : i32
    %c0_i32_0 = arith.constant 0 : i32
    return %c0_i32, %arg0 : i32, i32
  }
}

</mosaic_0001>

<llo_original>
// kernel: tpu_custom_call.1
$region0: #{tpu_custom_call.1}
  #allocation0 [shape = 'u32[]', space=smem, size = 0x4, offset = 0x4, fixed_abs, tag = 'smem constant byte address 0x4 - core index']
  #allocation1 [shape = 'u32[144,128]{1,0:T(1,128)}', space=vmem, size = 0x12000, scoped, tag = 'internal scratch']
  %s0 = inlined_call_operand.hbm [shape: f32[8,256], index: 0, kind: input, shape index: {}]
  %s1 = inlined_call_operand.hbm [shape: f32[8,256], index: 1, kind: input, shape index: {}]
  %s2 = inlined_call_operand.hbm [shape: f32[1,256], index: 2, kind: output, shape index: {}]
  %s3 = sld [smem:[#allocation0]]
  $region49: #{tpu_custom_call.1} parent=0
    _
  %s5 = ssub.s32 1, %s3
  %s6 = scalar_select 0, %s5, %s3
  $region1: #{tpu_custom_call.1} parent=0
    #allocation2 [shape = 'u8[8192]{0}', space=vmem, size = 0x2000, scoped, tag = 'input window, operand 0']
    #allocation3 [shape = 's32[2]{0}', space=sflag, size = 0x8, scoped, tag = 'scoped memory for tpu_custom_call.1']
    #allocation4 [shape = 's32[2]{0}', space=sflag, size = 0x8, scoped, tag = 'scoped memory for tpu_custom_call.1']
    #allocation5 [shape = 'u8[8192]{0}', space=vmem, size = 0x2000, scoped, tag = 'input window, operand 1']
    #allocation6 [shape = 's32[2]{0}', space=sflag, size = 0x8, scoped, tag = 'scoped memory for tpu_custom_call.1']
    #allocation7 [shape = 'u8[1024]{0}', space=vmem, size = 0x400, scoped, tag = 'output window, operand 0']
    %7 = vsyncpa [#allocation3], 0
    %s8 = scalar_lea.sflag [#allocation3], 1
    %9 = vsyncpa %s8, 0
    %10 = vsyncpa [#allocation6], 0
    %s11 = scalar_lea.sflag [#allocation6], 1
    %12 = vsyncpa %s11, 0
    %13 = vsyncpa [#allocation4], 0
    %s14 = scalar_lea.sflag [#allocation4], 1
    %15 = vsyncpa %s14, 0
    loop: start=0, step=1, limit=4
    $region2: #{tpu_custom_call.1} parent=1 // loop_pre_header
      _
    $region3: #{tpu_custom_call.1} parent=1 // loop_header
      %s17 = sphi 0, %s21
      %p18 = scmp.ge.s32.totalorder %s17, 4
      %s27 = sphi 0, %s29
      %s30 = sphi 0, %s27
      %s31 = sphi 0, %s30
      %s47 = sphi 0, %s31
      %s53 = sphi 0, %s55
      %s56 = sphi 0, %s53
      %s57 = sphi 0, %s56
      %s73 = sphi 0, %s57
      %s79 = sphi 0, %s81
      %s82 = sphi 0, %s79
      %s83 = sphi 0, %s82
      %s99 = sphi 0, %s83
    $region4: #{tpu_custom_call.1} parent=1 // loop_header_branch
      %20 = sbr.rel (%p18) target = $region8
    $region5: #{tpu_custom_call.1} parent=1 // loop_body
      %s22 = ssub.s32 %s17, 1
      %s23 = ssub.s32 %s17, 2
      %s24 = sadd.s32 %s17, 1
      %s25 = ssub.s32 %s17, %s24
      %p26 = scmp.eq.s32.totalorder %s25, 0
      %s28 = sadd.s32 %s27, 1
      %s29 = scalar_select %p26, %s27, %s28
      %p32 = pneg %p26
      %p33 = scmp.eq.s32.totalorder %s17, 1
      %p34 = por %p32, %p33
      %p35 = scmp.ne.s32.totalorder %s27, %s30
      %p36 = scmp.eq.s32.totalorder %s17, 0
      %p37 = por %p35, %p36
      %p38 = scmp.ne.s32.totalorder %s27, %s30
      %p39 = scmp.eq.s32.totalorder %s22, 1
      %p40 = por %p38, %p39
      %p41 = scmp.ne.s32.totalorder %s30, %s31
      %p42 = scmp.eq.s32.totalorder %s22, 0
      %p43 = por %p41, %p42
      %p44 = scmp.ne.s32.totalorder %s30, %s31
      %p45 = scmp.eq.s32.totalorder %s23, 1
      %p46 = por %p44, %p45
      %p48 = scmp.ne.s32.totalorder %s31, %s47
      %p49 = scmp.eq.s32.totalorder %s23, 0
      %p50 = por %p48, %p49
      %s51 = ssub.s32 %s17, %s24
      %p52 = scmp.eq.s32.totalorder %s51, 0
      %s54 = sadd.s32 %s53, 1
      %s55 = scalar_select %p52, %s53, %s54
      %p58 = pneg %p52
      %p59 = scmp.eq.s32.totalorder %s17, 1
      %p60 = por %p58, %p59
      %p61 = scmp.ne.s32.totalorder %s53, %s56
      %p62 = scmp.eq.s32.totalorder %s17, 0
      %p63 = por %p61, %p62
      %p64 = scmp.ne.s32.totalorder %s53, %s56
      %p65 = scmp.eq.s32.totalorder %s22, 1
      %p66 = por %p64, %p65
      %p67 = scmp.ne.s32.totalorder %s56, %s57
      %p68 = scmp.eq.s32.totalorder %s22, 0
      %p69 = por %p67, %p68
      %p70 = scmp.ne.s32.totalorder %s56, %s57
      %p71 = scmp.eq.s32.totalorder %s23, 1
      %p72 = por %p70, %p71
      %p74 = scmp.ne.s32.totalorder %s57, %s73
      %p75 = scmp.eq.s32.totalorder %s23, 0
      %p76 = por %p74, %p75
      %s77 = ssub.s32 %s17, %s24
      %p78 = scmp.eq.s32.totalorder %s77, 0
      %s80 = sadd.s32 %s79, 1
      %s81 = scalar_select %p78, %s79, %s80
      %p84 = pneg %p78
      %p85 = scmp.eq.s32.totalorder %s17, 1
      %p86 = por %p84, %p85
      %p87 = scmp.ne.s32.totalorder %s79, %s82
      %p88 = scmp.eq.s32.totalorder %s17, 0
      %p89 = por %p87, %p88
      %p90 = scmp.ne.s32.totalorder %s79, %s82
      %p91 = scmp.eq.s32.totalorder %s22, 1
      %p92 = por %p90, %p91
      %p93 = scmp.ne.s32.totalorder %s82, %s83
      %p94 = scmp.eq.s32.totalorder %s22, 0
      %p95 = por %p93, %p94
      %p96 = scmp.ne.s32.totalorder %s82, %s83
      %p97 = scmp.eq.s32.totalorder %s23, 1
      %p98 = por %p96, %p97
      %p100 = scmp.ne.s32.totalorder %s83, %s99
      %p101 = scmp.eq.s32.totalorder %s23, 0
      %p102 = por %p100, %p101
      %p103 = scmp.le.s32.totalorder 1, %s17
      %p104 = scmp.lt.s32.totalorder %s17, 3
      %p105 = pnand %p103, %p104
      %p106 = pneg %p105
      // Predicated region
      $region9: #{tpu_custom_call.1} parent=5 // pred_check
        _
      $region10: #{tpu_custom_call.1} parent=5 // pred_check_branch
        %108 = sbr.rel (%p105) target = $region12
      $region11: #{tpu_custom_call.1} parent=5 // pred_region
        %s109 = ssub.s32 %s17, 1
      $region12: #{tpu_custom_call.1} parent=5 // pred_fallthru
        _
      %p110 = scmp.lt.s32.totalorder %s17, 2
      // Predicated region
      $region13: #{tpu_custom_call.1} parent=5 // pred_check
        %p111 = pneg %p110
      $region14: #{tpu_custom_call.1} parent=5 // pred_check_branch
        %113 = sbr.rel (%p111) target = $region16
      $region15: #{tpu_custom_call.1} parent=5 // pred_region
        // Predicated region
        $region17: #{tpu_custom_call.1} parent=15 // pred_check
          %p114 = pneg %p37
        $region18: #{tpu_custom_call.1} parent=15 // pred_check_branch
          %116 = sbr.rel (%p114) target = $region20
        $region19: #{tpu_custom_call.1} parent=15 // pred_region
          %s117 = sand.u32 %s27, 1
          %s118 = scalar_lea.sflag [#allocation3], %s117
          %s119 = sand.u32 %s27, 1
          %s120 = smul.addr %s119, 8
          %s121 = scalar_lea.vmem [#allocation2], %s120
          %s123 = ssub.s32 128, 128
          %124 = vsyncadd %s118, %s123
          %s125 = smul.addr %s17, 128
          %s126 = scalar_lea.hbm %s0, %s125
          %s128 = sshll.u32 %s121, 4
          %s129 = int_to_ptr.vmem [resolvable:$true] %s128
          %131 = dma.hbm_to_vmem [thread:$0]  %s126, 128, %s129, %s118
        $region20: #{tpu_custom_call.1} parent=15 // pred_fallthru
          _
        // Predicated region
        $region21: #{tpu_custom_call.1} parent=15 // pred_check
          %p132 = pneg %p63
        $region22: #{tpu_custom_call.1} parent=15 // pred_check_branch
          %134 = sbr.rel (%p132) target = $region24
        $region23: #{tpu_custom_call.1} parent=15 // pred_region
          %s135 = sand.u32 %s53, 1
          %s136 = scalar_lea.sflag [#allocation6], %s135
          %s137 = sand.u32 %s53, 1
          %s138 = smul.addr %s137, 8
          %s139 = scalar_lea.vmem [#allocation5], %s138
          %s141 = ssub.s32 128, 128
          %142 = vsyncadd %s136, %s141
          %s143 = smul.addr %s17, 128
          %s144 = scalar_lea.hbm %s1, %s143
          %s146 = sshll.u32 %s139, 4
          %s147 = int_to_ptr.vmem [resolvable:$true] %s146
          %149 = dma.hbm_to_vmem [thread:$0]  %s144, 128, %s147, %s136
        $region24: #{tpu_custom_call.1} parent=15 // pred_fallthru
          _
      $region16: #{tpu_custom_call.1} parent=5 // pred_fallthru
        _
      %p150 = scmp.le.s32.totalorder 1, %s17
      %p151 = scmp.lt.s32.totalorder %s17, 3
      %p152 = pnand %p150, %p151
      %p153 = pneg %p152
      // Predicated region
      $region25: #{tpu_custom_call.1} parent=5 // pred_check
        _
      $region26: #{tpu_custom_call.1} parent=5 // pred_check_branch
        %155 = sbr.rel (%p152) target = $region28
      $region27: #{tpu_custom_call.1} parent=5 // pred_region
        %s156 = ssub.s32 %s17, 1
        %s157 = sand.u32 %s30, 1
        %s158 = scalar_lea.sflag [#allocation3], %s157
        %s159 = sand.u32 %s30, 1
        %s160 = smul.addr %s159, 8
        %s161 = scalar_lea.vmem [#allocation2], %s160
        // Predicated region
        $region29: #{tpu_custom_call.1} parent=27 // pred_check
          %p162 = pneg %p43
        $region30: #{tpu_custom_call.1} parent=27 // pred_check_branch
          %164 = sbr.rel (%p162) target = $region32
        $region31: #{tpu_custom_call.1} parent=27 // pred_region
          %165 = dma.done %s158, 128
        $region32: #{tpu_custom_call.1} parent=27 // pred_fallthru
          _
        %s166 = sand.u32 %s56, 1
        %s167 = scalar_lea.sflag [#allocation6], %s166
        %s168 = sand.u32 %s56, 1
        %s169 = smul.addr %s168, 8
        %s170 = scalar_lea.vmem [#allocation5], %s169
        // Predicated region
        $region33: #{tpu_custom_call.1} parent=27 // pred_check
          %p171 = pneg %p69
        $region34: #{tpu_custom_call.1} parent=27 // pred_check_branch
          %173 = sbr.rel (%p171) target = $region36
        $region35: #{tpu_custom_call.1} parent=27 // pred_region
          %174 = dma.done %s167, 128
        $region36: #{tpu_custom_call.1} parent=27 // pred_fallthru
          _
        %s175 = sand.u32 %s30, 1
        %s176 = scalar_lea.sflag [#allocation3], %s175
        %s177 = sand.u32 %s30, 1
        %s178 = smul.addr %s177, 8
        %s179 = scalar_lea.vmem [#allocation2], %s178
        %p180 = pneg %p43
        %p181 = pneg %p40
        %s182 = sand.u32 %s56, 1
        %s183 = scalar_lea.sflag [#allocation6], %s182
        %s184 = sand.u32 %s56, 1
        %s185 = smul.addr %s184, 8
        %s186 = scalar_lea.vmem [#allocation5], %s185
        %p187 = pneg %p69
        %p188 = pneg %p66
        %p189 = pneg %p95
        %p190 = pneg %p92
        %s191 = sand.u32 %s82, 1
        %s192 = scalar_lea.sflag [#allocation4], %s191
        %s193 = sand.u32 %s82, 1
        %s194 = scalar_lea.vmem [#allocation7], %s193
        %v195 = vld [vmem:[%s161] sm:$0xff]
        %v196 = vld [vmem:[%s170] sm:$0xff]
        %v198 = vrot.slane %v195, 4
        %v201 = vrot.slane %v196, 4
        %v203 = vmul.f32 %v195, %v196
        %v204 = vmul.f32 %v195, %v201
        %v205 = vmul.f32 %v198, %v196
        %v206 = vmul.f32 %v198, %v201
        %v207 = vmul.f32 %v195, %v198
        %v208 = vmul.f32 %v196, %v201
        %vm209 = vcmask 1043456
        %v210 = vsel %vm209, %v203, 0.0
        %v211 = vrot.slane %v210, 4
        %v212 = vadd.f32 %v210, %v211
        %v213 = vrot.slane %v212, 2
        %v214 = vadd.f32 %v212, %v213
        %v215 = vrot.slane %v214, 1
        %v216 = vadd.f32 %v214, %v215
        %v217 = vsel %vm209, %v204, 0.0
        %v218 = vrot.slane %v217, 4
        %v219 = vadd.f32 %v217, %v218
        %v220 = vrot.slane %v219, 2
        %v221 = vadd.f32 %v219, %v220
        %v222 = vrot.slane %v221, 1
        %v223 = vadd.f32 %v221, %v222
        %v224 = vsel %vm209, %v205, 0.0
        %v225 = vrot.slane %v224, 4
        %v226 = vadd.f32 %v224, %v225
        %v227 = vrot.slane %v226, 2
        %v228 = vadd.f32 %v226, %v227
        %v229 = vrot.slane %v228, 1
        %v230 = vadd.f32 %v228, %v229
        %v231 = vsel %vm209, %v206, 0.0
        %v232 = vrot.slane %v231, 4
        %v233 = vadd.f32 %v231, %v232
        %v234 = vrot.slane %v233, 2
        %v235 = vadd.f32 %v233, %v234
        %v236 = vrot.slane %v235, 1
        %v237 = vadd.f32 %v235, %v236
        %v238 = vsel %vm209, %v207, 0.0
        %v239 = vrot.slane %v238, 4
        %v240 = vadd.f32 %v238, %v239
        %v241 = vrot.slane %v240, 2
        %v242 = vadd.f32 %v240, %v241
        %v243 = vrot.slane %v242, 1
        %v244 = vadd.f32 %v242, %v243
        %v245 = vsel %vm209, %v208, 0.0
        %v246 = vrot.slane %v245, 4
        %v247 = vadd.f32 %v245, %v246
        %v248 = vrot.slane %v247, 2
        %v249 = vadd.f32 %v247, %v248
        %v250 = vrot.slane %v249, 1
        %v251 = vadd.f32 %v249, %v250
        %vm252 = vcmask 1040384
        %v253 = vsel %vm252, %v216, %v244
        %vm254 = vcmask 1041408
        %v255 = vsel %vm254, %v253, %v223
        %v256 = vsel %vm252, %v237, %v244
        %v257 = vsel %vm254, %v256, %v230
        %v258 = vsel %vm252, %v216, %v251
        %v259 = vsel %vm254, %v258, %v230
        %v260 = vsel %vm252, %v237, %v251
        %v261 = vsel %vm254, %v260, %v223
        %vm262 = vcmask 1042432
        %v263 = vsel %vm262, %v255, -inf
        %v264 = vrot.slane %v263, 4
        %v265 = vmax.f32 %v263, %v264
        %v266 = vrot.slane %v265, 2
        %v267 = vmax.f32 %v265, %v266
        %v268 = vrot.slane %v267, 1
        %v269 = vmax.f32 %v267, %v268
        %v270 = vsel %vm262, %v257, -inf
        %v271 = vrot.slane %v270, 4
        %v272 = vmax.f32 %v270, %v271
        %v273 = vrot.slane %v272, 2
        %v274 = vmax.f32 %v272, %v273
        %v275 = vrot.slane %v274, 1
        %v276 = vmax.f32 %v274, %v275
        %v277 = vsel %vm262, %v259, -inf
        %v278 = vrot.slane %v277, 4
        %v279 = vmax.f32 %v277, %v278
        %v280 = vrot.slane %v279, 2
        %v281 = vmax.f32 %v279, %v280
        %v282 = vrot.slane %v281, 1
        %v283 = vmax.f32 %v281, %v282
        %v284 = vsel %vm262, %v261, -inf
        %v285 = vrot.slane %v284, 4
        %v286 = vmax.f32 %v284, %v285
        %v287 = vrot.slane %v286, 2
        %v288 = vmax.f32 %v286, %v287
        %v289 = vrot.slane %v288, 1
        %v290 = vmax.f32 %v288, %v289
        %v291 = vsub.f32 %v255, %v269
        %v292 = vsub.f32 %v257, %v276
        %v293 = vsub.f32 %v259, %v283
        %v294 = vsub.f32 %v261, %v290
        %v295 = vmul.f32 %v291, 1.442695
        %v296 = vpow.pop %v295
        %v297 = vmul.f32 %v292, 1.442695
        %v298 = vpow.pop %v297
        %v299 = vmul.f32 %v293, 1.442695
        %v300 = vpow.pop %v299
        %v301 = vmul.f32 %v294, 1.442695
        %v302 = vpow.pop %v301
        %v303 = vsel %vm262, %v296, 0.0
        %v304 = vrot.slane %v303, 4
        %v305 = vadd.f32 %v303, %v304
        %v306 = vrot.slane %v305, 2
        %v307 = vadd.f32 %v305, %v306
        %v308 = vrot.slane %v307, 1
        %v309 = vadd.f32 %v307, %v308
        %v310 = vsel %vm262, %v298, 0.0
        %v311 = vrot.slane %v310, 4
        %v312 = vadd.f32 %v310, %v311
        %v313 = vrot.slane %v312, 2
        %v314 = vadd.f32 %v312, %v313
        %v315 = vrot.slane %v314, 1
        %v316 = vadd.f32 %v314, %v315
        %v317 = vsel %vm262, %v300, 0.0
        %v318 = vrot.slane %v317, 4
        %v319 = vadd.f32 %v317, %v318
        %v320 = vrot.slane %v319, 2
        %v321 = vadd.f32 %v319, %v320
        %v322 = vrot.slane %v321, 1
        %v323 = vadd.f32 %v321, %v322
        %v324 = vsel %vm262, %v302, 0.0
        %v325 = vrot.slane %v324, 4
        %v326 = vadd.f32 %v324, %v325
        %v327 = vrot.slane %v326, 2
        %v328 = vadd.f32 %v326, %v327
        %v329 = vrot.slane %v328, 1
        %v330 = vadd.f32 %v328, %v329
        %v331 = vlog2.pop %v309
        %v332 = vmul.f32 %v331, 0.6931472
        %v333 = vlog2.pop %v316
        %v334 = vmul.f32 %v333, 0.6931472
        %v335 = vlog2.pop %v323
        %v336 = vmul.f32 %v335, 0.6931472
        %v337 = vlog2.pop %v330
        %v338 = vmul.f32 %v337, 0.6931472
        %v339 = vadd.f32 %v269, %v332
        %v340 = vadd.f32 %v276, %v334
        %v341 = vadd.f32 %v283, %v336
        %v342 = vadd.f32 %v290, %v338
        %v343 = vsub.f32 %v339, %v255
        %v344 = vsub.f32 %v340, %v257
        %v345 = vsub.f32 %v341, %v259
        %v346 = vsub.f32 %v342, %v261
        %v347 = vsel %vm252, %v343, 0.0
        %v348 = vsel %vm252, %v344, 0.0
        %v349 = vadd.f32 %v347, %v348
        %v350 = vsel %vm252, %v345, 0.0
        %v351 = vadd.f32 %v349, %v350
        %v352 = vsel %vm252, %v346, 0.0
        %v353 = vadd.f32 %v351, %v352
        %v354 = vmul.f32 %v353, 0.25
        %355 = vst [vmem:[%s194] sm:$0x1] %v354
        %s356 = sand.u32 %s82, 1
        %s357 = scalar_lea.sflag [#allocation4], %s356
        %s358 = sand.u32 %s82, 1
        %s359 = scalar_lea.vmem [#allocation7], %s358
        // Predicated region
        $region37: #{tpu_custom_call.1} parent=27 // pred_check
          %p360 = pneg %p92
        $region38: #{tpu_custom_call.1} parent=27 // pred_check_branch
          %362 = sbr.rel (%p360) target = $region40
        $region39: #{tpu_custom_call.1} parent=27 // pred_region
          %s364 = ssub.s32 16, 16
          %365 = vsyncadd %s357, %s364
          %s366 = smul.addr %s22, 16
          %s367 = scalar_lea.hbm %s2, %s366
          %s369 = sshll.u32 %s359, 4
          %s370 = int_to_ptr.vmem [resolvable:$true] %s369
          %372 = dma.vmem_to_hbm [thread:$0]  %s370, 16, %s367, %s357
        $region40: #{tpu_custom_call.1} parent=27 // pred_fallthru
          _
      $region28: #{tpu_custom_call.1} parent=5 // pred_fallthru
        _
      %p373 = scmp.le.s32.totalorder 2, %s17
      // Predicated region
      $region41: #{tpu_custom_call.1} parent=5 // pred_check
        %p374 = pneg %p373
      $region42: #{tpu_custom_call.1} parent=5 // pred_check_branch
        %376 = sbr.rel (%p374) target = $region44
      $region43: #{tpu_custom_call.1} parent=5 // pred_region
        %s377 = ssub.s32 %s17, 2
        // Predicated region
        $region45: #{tpu_custom_call.1} parent=43 // pred_check
          %p378 = pneg %p98
        $region46: #{tpu_custom_call.1} parent=43 // pred_check_branch
          %380 = sbr.rel (%p378) target = $region48
        $region47: #{tpu_custom_call.1} parent=43 // pred_region
          %s381 = sand.u32 %s83, 1
          %s382 = scalar_lea.sflag [#allocation4], %s381
          %s383 = sand.u32 %s83, 1
          %s384 = scalar_lea.vmem [#allocation7], %s383
          %385 = dma.done %s382, 16
        $region48: #{tpu_custom_call.1} parent=43 // pred_fallthru
          _
      $region44: #{tpu_custom_call.1} parent=5 // pred_fallthru
        _
    $region6: #{tpu_custom_call.1} parent=1 // loop_footer
      %s21 = sadd.s32 1, %s17
    $region7: #{tpu_custom_call.1} parent=1 // loop_footer_branch
      %16 = sbr.rel target = $region3
    $region8: #{tpu_custom_call.1} parent=1 // loop_exit
      _
    %386 = vsyncpa [#allocation3], 1
    %s387 = scalar_lea.sflag [#allocation3], 1
    %388 = vsyncpa %s387, 1
    %389 = vsyncpa [#allocation6], 1
    %s390 = scalar_lea.sflag [#allocation6], 1
    %391 = vsyncpa %s390, 1
    %392 = vsyncpa [#allocation4], 1
    %s393 = scalar_lea.sflag [#allocation4], 1
    %394 = vsyncpa %s393, 1

</llo_original>
